<compile_context>
chip_gen: v7x
topology: tpu7x:2x2x1
jax: 0.10.0
libtpu: 0.0.40
codegen_flags: <defaults>
</compile_context>

<pallas_src>
import jax
import jax.numpy as jnp
from jax.experimental import pallas as pl
from jax.experimental.pallas import tpu as pltpu


_MAX_DMA_CHUNKS = 4            # 2-4 outstanding DMAs is plenty for a local copy
_CHUNK_BYTES_THRESHOLD = 1 << 20  # only bother chunking copies >= 1 MiB


def _make_identity_kernel(chunk_bounds):
    """Build a kernel that DMA-copies the input HBM buffer to the output HBM buffer.

    chunk_bounds: tuple of static (start, size) slices along the leading axis.
    An empty tuple means "copy the whole array with a single DMA".
    """

    def kernel(x_hbm, o_hbm, sems):
        copies = []
        if not chunk_bounds:
            cp = pltpu.make_async_copy(x_hbm, o_hbm, sems.at[0])
            cp.start()
            copies.append(cp)
        else:
            for idx, (start, size) in enumerate(chunk_bounds):
                cp = pltpu.make_async_copy(
                    x_hbm.at[pl.ds(start, size)],
                    o_hbm.at[pl.ds(start, size)],
                    sems.at[idx],
                )
                cp.start()
                copies.append(cp)
        # All DMAs are in flight; now block on each completion semaphore.
        for cp in copies:
            cp.wait()

    return kernel


def identity(x: jax.Array) -> jax.Array:
    """Identity forward pass: returns an array equal to x (same shape/dtype)."""
    # Trivial cases: nothing to copy (and 0-d arrays cannot be sliced).
    if x.ndim == 0 or x.size == 0:
        return x

    nbytes = x.size * x.dtype.itemsize
    lead = x.shape[0]

    # Chunk only along a *major* (non-tiled) leading axis so every DMA slice is
    # tile-aligned regardless of dtype; small or 1D/2D arrays use a single DMA
    # (one contiguous HBM->HBM transfer already sits at the HBM roofline).
    if nbytes >= _CHUNK_BYTES_THRESHOLD and x.ndim >= 3 and lead >= _MAX_DMA_CHUNKS:
        n = _MAX_DMA_CHUNKS
        base, rem = divmod(lead, n)
        bounds = []
        start = 0
        for i in range(n):
            size = base + (1 if i < rem else 0)
            bounds.append((start, size))
            start += size
        chunk_bounds = tuple(bounds)
        num_sems = n
    else:
        chunk_bounds = ()
        num_sems = 1

    kernel = _make_identity_kernel(chunk_bounds)

    return pl.pallas_call(
        kernel,
        out_shape=jax.ShapeDtypeStruct(x.shape, x.dtype),
        in_specs=[pl.BlockSpec(memory_space=pl.ANY)],   # raw HBM ref, no auto-DMA
        out_specs=pl.BlockSpec(memory_space=pl.ANY),    # raw HBM ref, written by DMA
        scratch_shapes=[pltpu.SemaphoreType.DMA((num_sems,))],
    )(x)


if __name__ == "__main__":
    key = jax.random.PRNGKey(0)
    k1, k2, k3 = jax.random.split(key, 3)
    identity_fn = jax.jit(identity)

    # Small NCHW input consistent with typical usage of Identity in the model.
    x = jax.random.normal(k1, (2, 4, 16, 16), dtype=jnp.float32)
    y = jax.block_until_ready(identity_fn(x))
    assert y.shape == x.shape and y.dtype == x.dtype
    assert bool(jnp.array_equal(y, x))

    # Odd, non-128-aligned shape with a sub-32-bit dtype: no padding needed.
    x2 = jax.random.normal(k2, (3, 5, 7), dtype=jnp.bfloat16)
    y2 = jax.block_until_ready(identity_fn(x2))
    assert y2.shape == x2.shape and y2.dtype == x2.dtype
    assert bool(jnp.array_equal(y2, x2))

    # Slightly larger 3D input exercises the chunked (4 outstanding DMAs) path.
    x3 = jax.random.normal(k3, (8, 256, 512), dtype=jnp.float32)  # 4 MiB
    y3 = jax.block_until_ready(identity_fn(x3))
    assert y3.shape == x3.shape and y3.dtype == x3.dtype
    assert bool(jnp.array_equal(y3, x3))

    print("KERNEL_OK")
</pallas_src>

<mosaic_0001>
module attributes {stable_mosaic.version = 11 : i64} {
  func.func @kernel(%arg0: memref<2x4x16x16xf32, #tpu.memory_space<any>>, %arg1: memref<2x4x16x16xf32, #tpu.memory_space<any>>, %arg2: memref<1x!tpu.dma_semaphore, #tpu.memory_space<semaphore_mem>>) attributes {dimension_semantics = [], scalar_prefetch = 0 : i64, scratch_operands = 1 : i64, tpu.core_type = #tpu.core_type<tc>} {
    %c0_i32 = arith.constant 0 : i32
    %0 = tpu.memref_slice %arg2[%c0_i32] : memref<1x!tpu.dma_semaphore, #tpu.memory_space<semaphore_mem>> -> memref<1x!tpu.dma_semaphore, #tpu.memory_space<semaphore_mem>>
    %1 = tpu.memref_squeeze %0 : memref<1x!tpu.dma_semaphore, #tpu.memory_space<semaphore_mem>> -> memref<!tpu.dma_semaphore, #tpu.memory_space<semaphore_mem>>
    tpu.enqueue_dma source(%arg0 : memref<2x4x16x16xf32, #tpu.memory_space<any>>) target(%arg1 : memref<2x4x16x16xf32, #tpu.memory_space<any>>) target_semaphore(%1 : memref<!tpu.dma_semaphore, #tpu.memory_space<semaphore_mem>>)
    %c0_i32_0 = arith.constant 0 : i32
    %2 = tpu.memref_slice %arg2[%c0_i32_0] : memref<1x!tpu.dma_semaphore, #tpu.memory_space<semaphore_mem>> -> memref<1x!tpu.dma_semaphore, #tpu.memory_space<semaphore_mem>>
    %3 = tpu.memref_squeeze %2 : memref<1x!tpu.dma_semaphore, #tpu.memory_space<semaphore_mem>> -> memref<!tpu.dma_semaphore, #tpu.memory_space<semaphore_mem>>
    tpu.wait_dma2 semaphore(%3 : memref<!tpu.dma_semaphore, #tpu.memory_space<semaphore_mem>>) src(%arg0 : memref<2x4x16x16xf32, #tpu.memory_space<any>>) dst(%arg1 : memref<2x4x16x16xf32, #tpu.memory_space<any>>)
    return
  }
}

</mosaic_0001>

<llo_original>
// kernel: identity.1
$region0: #{identity.1}
  #allocation0 [shape = 'u32[]', space=smem, size = 0x4, offset = 0x4, fixed_abs, tag = 'smem constant byte address 0x4 - core index']
  #allocation1 [shape = 'u32[144,128]{1,0:T(1,128)}', space=vmem, size = 0x12000, scoped, tag = 'internal scratch']
  #allocation2 [shape = 's32[1]{0}', space=sflag, size = 0x4, scoped, tag = 'scratch operand']
  #allocation3 [shape = 's32[]', space=sflag, size = 0x4, offset = 0, fixed_abs, tag = 'sflag constant byte address 0x0 - dummy sync flag']
  #allocation4 [shape = 'u32[0]{0}', space=smem, size = 0, offset = 0, fixed_abs, tag = 'smem constant byte address 0x0 - null']
  %s0 = inlined_call_operand.hbm [shape: f32[2,4,16,16], index: 0, kind: input, shape index: {}]
  %s1 = inlined_call_operand.hbm [shape: f32[2,4,16,16], index: 1, kind: output, shape index: {}]
  %s2 = sld [smem:[#allocation0]]
  $region2: #{identity.1} parent=0
    _
  %s4 = ssub.s32 1, %s2
  %s5 = scalar_select 0, %s4, %s2
  %s7 = sshll.u32 1, 14
  %s8 = sxor.u32 4294967295, %s7
  %s11 = sshll.u32 3, 24
  %s12 = sxor.u32 4294967295, %s11
  %s13 = sand.u32 0, %s12
  %s15 = sor.u32 %s13, 0
  %18 = dma.general %s0, 2048, %s1, [#allocation2], [#allocation3], [#allocation4], %s15, 0
  %s19 = smul.u32 2, 4
  %s20 = smul.u32 %s19, 16
  %s21 = smul.u32 %s20, 1
  %s22 = sshll.u32 %s21, 4
  %23 = dma.done [#allocation2], %s22
  %24 = vsyncmov [#allocation2]
  %s25 = vpop.sfrf %24
  %p26 = scmp.eq.s32.totalorder %s25, 0
  %p27 = pneg %p26
  %29 = shalt.err (%p27)

</llo_original>
